<compile_context>
chip_gen: v6e
topology: v6e:2x2x1
jax: 0.10.0
libtpu: 0.0.40
codegen_flags: <defaults>
</compile_context>

<pallas_src>
import functools
import math

import jax
import jax.numpy as jnp
from jax.experimental import pallas as pl
from jax.experimental.pallas import tpu as pltpu


def _round_up(n: int, m: int) -> int:
    return ((n + m - 1) // m) * m


# ---------------------------------------------------------------------------
# Kernel
# ---------------------------------------------------------------------------
def _stylesplit_kernel(x_ref, w_ref, b_ref, o_ref, *, cout_p):
    # x_ref: (TB, Cin)          MXU operand (native or bf16)
    # w_ref: (Cin, 3*Cout_p)    pre-transposed, gain-folded, lane-dense RHS
    # b_ref: (1, 3*Cout_p)      f32, bias_gain folded at prep time
    # o_ref: (TB, Cout_p)

    # Plain MK x KN contraction -> bare vmatmul, f32 accumulation.
    y = jnp.dot(x_ref[...], w_ref[...], preferred_element_type=jnp.float32)
    y = y + b_ref[...]  # already f32, gain folded

    # chunk(3, dim=1): static lane slices at 128-aligned boundaries.
    m1 = y[:, 0 * cout_p:1 * cout_p]
    m2 = y[:, 1 * cout_p:2 * cout_p]
    m3 = y[:, 2 * cout_p:3 * cout_p]

    o_ref[...] = (m1 * m2 + m3).astype(o_ref.dtype)


# ---------------------------------------------------------------------------
# One-time parameter preparation (NOT in the per-call path)
# ---------------------------------------------------------------------------
def prepare_style_split_params(weight, bias, lr_multiplier=1.0, mxu_dtype=None):
    """Fold equalized-lr gains, pad Cout up to a lane multiple, transpose to
    [Cin, 3*Cout_p] (lane-dense MXU layout), optionally cast to bf16.

    Returns (w_t, b_packed, Cout):
      w_t      : [Cin, 3*Cout_p]  (mxu_dtype or f32)
      b_packed : [1, 3*Cout_p]    f32, bias_gain folded
    """
    C3, Cin = weight.shape
    assert C3 % 3 == 0
    Cout = C3 // 3

    weight_gain = float(lr_multiplier) / math.sqrt(float(Cin))
    bias_gain = float(lr_multiplier)

    w = weight.astype(jnp.float32) * weight_gain    # [3*Cout, Cin], exact ref fold
    b = bias.astype(jnp.float32) * bias_gain        # [3*Cout]

    # Lane-dense output: pad Cout to a multiple of 128 with zeros (padded lanes
    # compute 0*0+0 = 0 and are stripped after the kernel). No-op when Cout is
    # already 128-aligned (e.g. production Cout=512).
    cout_p = max(128, _round_up(Cout, 128))
    if cout_p != Cout:
        w = jnp.pad(w.reshape(3, Cout, Cin), ((0, 0), (0, cout_p - Cout), (0, 0)))
        w = w.reshape(3 * cout_p, Cin)
        b = jnp.pad(b.reshape(3, Cout), ((0, 0), (0, cout_p - Cout))).reshape(3 * cout_p)

    w_t = w.T                                       # [Cin, 3*cout_p]
    if mxu_dtype is not None:
        w_t = w_t.astype(mxu_dtype)                 # one-time cast (halves weight DMA)
    b_packed = b.reshape(1, 3 * cout_p)             # stays f32 for the f32 epilogue

    return w_t, b_packed, Cout


# ---------------------------------------------------------------------------
# Forward call
# ---------------------------------------------------------------------------
@functools.partial(jax.jit, static_argnames=("cout", "block_b", "mxu_dtype"))
def style_split(x, w_t, b_packed, cout, block_b=512, mxu_dtype=None):
    """x: (B, Cin); w_t: (Cin, 3*Cout_p); b_packed: (1, 3*Cout_p) -> (B, Cout)."""
    B, Cin = x.shape
    Cin_w, C3p = w_t.shape
    assert Cin == Cin_w and C3p % 3 == 0
    cout_p = C3p // 3
    out_dtype = x.dtype

    # Optional bf16 MXU operands (weight was already pre-cast at prep time).
    if mxu_dtype is not None and x.dtype != mxu_dtype:
        x = x.astype(mxu_dtype)

    # ---- B tiling: prefer >= 2 grid steps (v7x has 2 TensorCores). ----
    if B <= 8:
        tb = B                                   # can't split below the sublane quantum
    elif B <= block_b:
        tb = max(8, _round_up(-(-B // 2), 8))    # ~B/2 per tile, multiple of 8
    else:
        tb = block_b

    # ---- Explicit VMEM budgeting (v5e 16 MiB / v7x 32 MiB scoped defaults). ----
    xb = jnp.dtype(x.dtype).itemsize
    wb = jnp.dtype(w_t.dtype).itemsize
    ob = jnp.dtype(out_dtype).itemsize

    def vmem_need(t):
        return (2 * t * Cin * xb            # x tile, double-buffered
                + 2 * t * cout_p * ob       # out tile, double-buffered
                + 2 * Cin * C3p * wb        # resident weight (conservatively x2)
                + 2 * C3p * 4               # resident bias
                + t * C3p * 4)              # f32 y intermediate

    while tb > 8 and vmem_need(tb) > 48 * 1024 * 1024:
        tb = max(8, _round_up(tb // 2, 8))

    grid = (pl.cdiv(B, tb),)
    vmem_limit = min(64 * 1024 * 1024,
                     max(32 * 1024 * 1024, int(1.25 * vmem_need(tb))))

    cost = pl.CostEstimate(
        flops=2 * B * Cin * C3p,
        transcendentals=0,
        bytes_accessed=B * Cin * xb + Cin * C3p * wb + C3p * 4 + B * cout_p * ob,
    )

    out_p = pl.pallas_call(
        functools.partial(_stylesplit_kernel, cout_p=cout_p),
        out_shape=jax.ShapeDtypeStruct((B, cout_p), out_dtype),
        grid_spec=pltpu.PrefetchScalarGridSpec(
            num_scalar_prefetch=0,
            grid=grid,
            in_specs=[
                pl.BlockSpec((tb, Cin), lambda i: (i, 0)),     # x tile (pipelined)
                pl.BlockSpec((Cin, C3p), lambda i: (0, 0)),    # weight, VMEM-resident
                pl.BlockSpec((1, C3p), lambda i: (0, 0)),      # bias, VMEM-resident
            ],
            out_specs=pl.BlockSpec((tb, cout_p), lambda i: (i, 0)),
        ),
        compiler_params=pltpu.CompilerParams(
            dimension_semantics=("parallel",),   # shard B tiles across TCs on v7x
            vmem_limit_bytes=vmem_limit,
        ),
        cost_estimate=cost,
    )(x, w_t, b_packed)

    if cout_p != cout:
        out_p = out_p[:, :cout]
    return out_p


# ---------------------------------------------------------------------------
# Pure-JAX reference of the PyTorch forward
# ---------------------------------------------------------------------------
def style_split_ref(x, weight, bias, lr_multiplier=1.0):
    Cin = x.shape[1]
    weight_gain = lr_multiplier / math.sqrt(float(Cin))
    y = x.astype(jnp.float32) @ (weight.astype(jnp.float32) * weight_gain).T
    y = y + bias.astype(jnp.float32) * lr_multiplier
    m1, m2, m3 = jnp.split(y, 3, axis=1)
    return (m1 * m2 + m3).astype(x.dtype)


if __name__ == "__main__":
    # Small shapes consistent with the module: style vector in, 3*Cout projection.
    B, Cin, Cout = 8, 32, 32

    key = jax.random.PRNGKey(0)
    kx, kw, kb = jax.random.split(key, 3)

    x = jax.random.normal(kx, (B, Cin), dtype=jnp.float32)
    weight = jax.random.normal(kw, (3 * Cout, Cin), dtype=jnp.float32)  # [out, in]
    bias = 0.1 * jax.random.normal(kb, (3 * Cout,), dtype=jnp.float32)

    ref = style_split_ref(x, weight, bias)

    # Exact path: f32 MXU operands (matches the reference fold order bit-for-bit
    # up to accumulation order).
    w_t, b_p, cout = prepare_style_split_params(weight, bias)
    out = jax.block_until_ready(style_split(x, w_t, b_p, cout=cout))
    assert out.shape == (B, Cout)
    assert jnp.allclose(out, ref, atol=1e-4, rtol=1e-4), "f32 path mismatch vs reference"

    # Perf path: bf16 MXU operands (full-rate MXU, half the weight DMA bytes),
    # f32 accumulation and epilogue.
    w_t16, b_p16, cout16 = prepare_style_split_params(weight, bias, mxu_dtype=jnp.bfloat16)
    out16 = jax.block_until_ready(
        style_split(x, w_t16, b_p16, cout=cout16, mxu_dtype=jnp.bfloat16))
    assert out16.shape == (B, Cout)
    assert jnp.allclose(out16, ref, atol=1e-1, rtol=1e-1), "bf16 path mismatch vs reference"

    print("KERNEL_OK")
</pallas_src>

<mosaic_0001>
module attributes {stable_mosaic.version = 11 : i64} {
  func.func @_stylesplit_kernel(%arg0: i32, %arg1: memref<8x32xf32, #tpu.memory_space<vmem>>, %arg2: memref<32x384xf32, #tpu.memory_space<vmem>>, %arg3: memref<1x384xf32, #tpu.memory_space<vmem>>, %arg4: memref<8x128xf32, #tpu.memory_space<vmem>>) attributes {dimension_semantics = [#tpu.dimension_semantics<parallel>], iteration_bounds = array<i64: 1>, scalar_prefetch = 0 : i64, scratch_operands = 0 : i64, tpu.core_type = #tpu.core_type<tc>, window_params = [{transform_indices = @transform_0, window_bounds = array<i64: 8, 32>}, {pipeline_mode = #tpu.pipeline_mode<synchronous>, transform_indices = @transform_1, window_bounds = array<i64: 32, 384>}, {pipeline_mode = #tpu.pipeline_mode<synchronous>, transform_indices = @transform_2, window_bounds = array<i64: 1, 384>}, {transform_indices = @transform_3, window_bounds = array<i64: 8, 128>}]} {
    %c0 = arith.constant 0 : index
    %c0_0 = arith.constant 0 : index
    %0 = vector.load %arg1[%c0, %c0_0] : memref<8x32xf32, #tpu.memory_space<vmem>>, vector<8x32xf32>
    %c0_1 = arith.constant 0 : index
    %c0_2 = arith.constant 0 : index
    %1 = vector.load %arg2[%c0_1, %c0_2] : memref<32x384xf32, #tpu.memory_space<vmem>>, vector<32x384xf32>
    %cst = arith.constant dense<0.000000e+00> : vector<8x384xf32>
    %2 = tpu.matmul %0, %1, %cst {dimension_numbers = #tpu.dot_dimension_numbers<[1], [0], [0], [1], [0, 0, 1, 1], [], []>} : vector<8x32xf32>, vector<32x384xf32>, vector<8x384xf32> -> vector<8x384xf32>
    %c0_3 = arith.constant 0 : index
    %c0_4 = arith.constant 0 : index
    %3 = vector.load %arg3[%c0_3, %c0_4] : memref<1x384xf32, #tpu.memory_space<vmem>>, vector<1x384xf32>
    %4 = vector.broadcast %3 : vector<1x384xf32> to vector<8x384xf32>
    %5 = arith.addf %2, %4 : vector<8x384xf32>
    %6 = vector.extract_strided_slice %5 {offsets = [0, 0], sizes = [8, 128], strides = [1, 1]} : vector<8x384xf32> to vector<8x128xf32>
    %7 = vector.extract_strided_slice %5 {offsets = [0, 128], sizes = [8, 128], strides = [1, 1]} : vector<8x384xf32> to vector<8x128xf32>
    %8 = vector.extract_strided_slice %5 {offsets = [0, 256], sizes = [8, 128], strides = [1, 1]} : vector<8x384xf32> to vector<8x128xf32>
    %9 = arith.mulf %6, %7 : vector<8x128xf32>
    %10 = arith.addf %9, %8 : vector<8x128xf32>
    %c0_5 = arith.constant 0 : index
    %c0_6 = arith.constant 0 : index
    %11 = vector.load %arg4[%c0_5, %c0_6] : memref<8x128xf32, #tpu.memory_space<vmem>>, vector<8x128xf32>
    tpu.vector_store %arg4[%c0_5, %c0_6], %10 {strides = array<i32>} : memref<8x128xf32, #tpu.memory_space<vmem>>, vector<8x128xf32>,
    return
  }
  func.func @transform_0(%arg0: i32) -> (i32, i32) {
    %c0_i32 = arith.constant 0 : i32
    %c0_i32_0 = arith.constant 0 : i32
    return %arg0, %c0_i32 : i32, i32
  }
  func.func @transform_1(%arg0: i32) -> (i32, i32) {
    %c0_i32 = arith.constant 0 : i32
    %c0_i32_0 = arith.constant 0 : i32
    %c0_i32_1 = arith.constant 0 : i32
    return %c0_i32, %c0_i32_0 : i32, i32
  }
  func.func @transform_2(%arg0: i32) -> (i32, i32) {
    %c0_i32 = arith.constant 0 : i32
    %c0_i32_0 = arith.constant 0 : i32
    %c0_i32_1 = arith.constant 0 : i32
    return %c0_i32, %c0_i32_0 : i32, i32
  }
  func.func @transform_3(%arg0: i32) -> (i32, i32) {
    %c0_i32 = arith.constant 0 : i32
    %c0_i32_0 = arith.constant 0 : i32
    return %arg0, %c0_i32 : i32, i32
  }
}

</mosaic_0001>

<llo_original>
// kernel: style_split.1
$region0: #{style_split.1}
  #allocation0 [shape = 'u32[]', space=smem, size = 0x4, offset = 0x4, fixed_abs, tag = 'smem constant byte address 0x4 - core index']
  #allocation1 [shape = 'u32[144,128]{1,0:T(1,128)}', space=vmem, size = 0x12000, scoped, tag = 'internal scratch']
  %s0 = inlined_call_operand.hbm [shape: f32[8,32], index: 0, kind: input, shape index: {}]
  %s1 = inlined_call_operand.hbm [shape: f32[32,384], index: 1, kind: input, shape index: {}]
  %s2 = inlined_call_operand.vmem [shape: f32[1,384], index: 2, kind: input, shape index: {}]
  %s3 = inlined_call_operand.hbm [shape: f32[8,128], index: 3, kind: output, shape index: {}]
  %s4 = sld [smem:[#allocation0]]
  $region30: #{style_split.1} parent=0
    _
  %s6 = ssub.s32 1, %s4
  %s7 = scalar_select 0, %s6, %s4
  $region1: #{style_split.1} parent=0
    #allocation2 [shape = 'u8[4096]{0}', space=vmem, size = 0x1000, scoped, tag = 'input window, operand 0, single buffered']
    #allocation3 [shape = 's32[1]{0}', space=sflag, size = 0x4, scoped, tag = 'scoped memory for style_split.1']
    #allocation4 [shape = 's32[1]{0}', space=sflag, size = 0x4, scoped, tag = 'scoped memory for style_split.1']
    #allocation5 [shape = 'u8[49152]{0}', space=vmem, size = 0xc000, scoped, tag = 'input window, operand 1, single buffered']
    #allocation6 [shape = 's32[1]{0}', space=sflag, size = 0x4, scoped, tag = 'scoped memory for style_split.1']
    #allocation7 [shape = 'u8[4096]{0}', space=vmem, size = 0x1000, scoped, tag = 'output window, operand 0, single buffered']
    %8 = vsyncpa [#allocation3], 0
    %9 = vsyncpa [#allocation6], 0
    %10 = vsyncpa [#allocation4], 0
    // Predicated region
    $region2: #{style_split.1} parent=1 // pred_check
      _
    $region3: #{style_split.1} parent=1 // pred_check_branch
      %12 = sbr.rel (0) target = $region5
    $region4: #{style_split.1} parent=1 // pred_region
      %s14 = ssub.s32 128, 128
      %15 = vsyncadd [#allocation3], %s14
      %s17 = sshll.u32 [#allocation2], 4
      %s18 = int_to_ptr.vmem [resolvable:$true] %s17
      %20 = dma.hbm_to_vmem [thread:$0]  %s0, 128, %s18, [#allocation3]
    $region5: #{style_split.1} parent=1 // pred_fallthru
      _
    // Predicated region
    $region6: #{style_split.1} parent=1 // pred_check
      _
    $region7: #{style_split.1} parent=1 // pred_check_branch
      %22 = sbr.rel (0) target = $region9
    $region8: #{style_split.1} parent=1 // pred_region
      %s24 = ssub.s32 1536, 1536
      %25 = vsyncadd [#allocation6], %s24
      %s26 = sshll.u32 [#allocation5], 4
      %s27 = int_to_ptr.vmem [resolvable:$true] %s26
      %32 = dma.hbm_to_vmem [thread:$0]  %s1, 1536, %s27, [#allocation6], 384, 384, 24
    $region9: #{style_split.1} parent=1 // pred_fallthru
      _
    // Predicated region
    $region10: #{style_split.1} parent=1 // pred_check
      _
    $region11: #{style_split.1} parent=1 // pred_check_branch
      %34 = sbr.rel (0) target = $region13
    $region12: #{style_split.1} parent=1 // pred_region
      _
    $region13: #{style_split.1} parent=1 // pred_fallthru
      _
    // Predicated region
    $region14: #{style_split.1} parent=1 // pred_check
      _
    $region15: #{style_split.1} parent=1 // pred_check_branch
      %36 = sbr.rel (0) target = $region17
    $region16: #{style_split.1} parent=1 // pred_region
      %37 = dma.done [#allocation3], 128
    $region17: #{style_split.1} parent=1 // pred_fallthru
      _
    // Predicated region
    $region18: #{style_split.1} parent=1 // pred_check
      _
    $region19: #{style_split.1} parent=1 // pred_check_branch
      %39 = sbr.rel (0) target = $region21
    $region20: #{style_split.1} parent=1 // pred_region
      %40 = dma.done [#allocation6], 1536
    $region21: #{style_split.1} parent=1 // pred_fallthru
      _
    %v41 = vld [vmem:[#allocation2] sm:$0xff]
    %v42 = vld [vmem:[#allocation5] sm:$0xff]
    %v43 = vld [vmem:[#allocation5 + $0x8] sm:$0xff]
    %v44 = vld [vmem:[#allocation5 + $0x10] sm:$0xff]
    %v45 = vld [vmem:[#allocation5 + $0x18] sm:$0xff]
    %v46 = vld [vmem:[#allocation5 + $0x20] sm:$0xff]
    %v47 = vld [vmem:[#allocation5 + $0x28] sm:$0xff]
    %v48 = vld [vmem:[#allocation5 + $0x30] sm:$0xff]
    %v49 = vld [vmem:[#allocation5 + $0x38] sm:$0xff]
    %v50 = vld [vmem:[#allocation5 + $0x40] sm:$0xff]
    %v51 = vld [vmem:[#allocation5 + $0x48] sm:$0xff]
    %v52 = vld [vmem:[#allocation5 + $0x50] sm:$0xff]
    %v53 = vld [vmem:[#allocation5 + $0x58] sm:$0xff]
    %v54 = vld [vmem:[%s2] sm:$0x7]
    %v56 = vlaneseq
    %v57 = vshrl.u32 %v56, 7
    %v58 = vsub.s32 0, %v57
    %v59 = vrot.slane %v54, %v58
    %v60 = vlaneseq
    %v61 = vshrl.u32 %v60, 7
    %v62 = vsub.s32 1, %v61
    %v63 = vrot.slane %v54, %v62
    %v64 = vlaneseq
    %v65 = vshrl.u32 %v64, 7
    %v66 = vsub.s32 2, %v65
    %v67 = vrot.slane %v54, %v66
    %vm71 = vcmask 261120
    %v73 = vsel %vm71, %v41, 0
    %75 = vmatprep.subr.mxu0 0.0
    %76 = vmatpush1.msra.mxu0 0.0
    %77 = vmatprep.subr.mxu0 0.0
    %78 = vmatpush1.msra.mxu0 0.0
    %79 = vmatprep.subr.mxu0 0.0
    %80 = vmatpush1.msra.mxu0 0.0
    %81 = vmatprep.subr.mxu0 0.0
    %82 = vmatpush1.msra.mxu0 0.0
    %83 = vmatprep.subr.mxu0 0.0
    %84 = vmatpush1.msra.mxu0 0.0
    %85 = vmatprep.subr.mxu0 0.0
    %86 = vmatpush1.msra.mxu0 0.0
    %87 = vmatprep.subr.mxu0 0.0
    %88 = vmatpush1.msra.mxu0 0.0
    %89 = vmatprep.subr.mxu0 0.0
    %90 = vmatpush1.msra.mxu0 0.0
    %91 = vmatprep.subr.mxu0 0.0
    %92 = vmatpush1.msra.mxu0 0.0
    %93 = vmatprep.subr.mxu0 0.0
    %94 = vmatpush1.msra.mxu0 0.0
    %95 = vmatprep.subr.mxu0 0.0
    %96 = vmatpush1.msra.mxu0 0.0
    %97 = vmatprep.subr.mxu0 0.0
    %98 = vmatpush1.msra.mxu0 0.0
    %99 = vmatprep.subr.mxu0 %v52
    %100 = vmatpush1.msra.mxu0 %v51
    %101 = vmatprep.subr.mxu0 %v49
    %102 = vmatpush1.msra.mxu0 %v48
    %103 = vmatprep.subr.mxu0 %v46
    %104 = vmatpush1.msra.mxu0 %v45
    %105 = vmatprep.subr.mxu0 %v43
    %106 = vmatpush1.msra.mxu0 %v42
    %107 = vmatprep.subr.mxu0 0.0
    %108 = vmatpush2.msra.mxu0 0.0
    %109 = vmatprep.subr.mxu0 0.0
    %110 = vmatpush2.msra.mxu0 0.0
    %111 = vmatprep.subr.mxu0 0.0
    %112 = vmatpush2.msra.mxu0 0.0
    %113 = vmatprep.subr.mxu0 0.0
    %114 = vmatpush2.msra.mxu0 0.0
    %115 = vmatprep.subr.mxu0 0.0
    %116 = vmatpush2.msra.mxu0 0.0
    %117 = vmatprep.subr.mxu0 0.0
    %118 = vmatpush2.msra.mxu0 0.0
    %119 = vmatprep.subr.mxu0 0.0
    %120 = vmatpush2.msra.mxu0 0.0
    %121 = vmatprep.subr.mxu0 0.0
    %122 = vmatpush2.msra.mxu0 0.0
    %123 = vmatprep.subr.mxu0 0.0
    %124 = vmatpush2.msra.mxu0 0.0
    %125 = vmatprep.subr.mxu0 0.0
    %126 = vmatpush2.msra.mxu0 0.0
    %127 = vmatprep.subr.mxu0 0.0
    %128 = vmatpush2.msra.mxu0 0.0
    %129 = vmatprep.subr.mxu0 0.0
    %130 = vmatpush2.msra.mxu0 0.0
    %131 = vmatprep.subr.mxu0 0.0
    %132 = vmatpush2.msra.mxu0 0.0
    %133 = vmatprep.subr.mxu0 0.0
    %134 = vmatpush2.msra.mxu0 0.0
    %135 = vmatprep.subr.mxu0 0.0
    %136 = vmatpush2.msra.mxu0 0.0
    %137 = vmatprep.subr.mxu0 0.0
    %138 = vmatpush2.msra.mxu0 0.0
    %139 = vmatprep.mubr.f32.mxu0 0.0
    %140 = vmatmul.mubr.f32.gmra.mxu0 %v73
    %v141 = vpop.f32.mrf.mxu0
    %v142 = vadd.f32 %v59, %v141
    %v143 = vpop.f32.mrf.mxu0
    %v144 = vadd.f32 %v63, %v143
    %145 = vdwg.mxu0
    %146 = vmatprep.subr.mxu0 0.0
    %147 = vmatpush1.msra.mxu0 0.0
    %148 = vmatprep.subr.mxu0 0.0
    %149 = vmatpush1.msra.mxu0 0.0
    %150 = vmatprep.subr.mxu0 0.0
    %151 = vmatpush1.msra.mxu0 0.0
    %152 = vmatprep.subr.mxu0 0.0
    %153 = vmatpush1.msra.mxu0 0.0
    %154 = vmatprep.subr.mxu0 0.0
    %155 = vmatpush1.msra.mxu0 0.0
    %156 = vmatprep.subr.mxu0 0.0
    %157 = vmatpush1.msra.mxu0 0.0
    %158 = vmatprep.subr.mxu0 0.0
    %159 = vmatpush1.msra.mxu0 0.0
    %160 = vmatprep.subr.mxu0 0.0
    %161 = vmatpush1.msra.mxu0 0.0
    %162 = vmatprep.subr.mxu0 0.0
    %163 = vmatpush1.msra.mxu0 0.0
    %164 = vmatprep.subr.mxu0 0.0
    %165 = vmatpush1.msra.mxu0 0.0
    %166 = vmatprep.subr.mxu0 0.0
    %167 = vmatpush1.msra.mxu0 0.0
    %168 = vmatprep.subr.mxu0 0.0
    %169 = vmatpush1.msra.mxu0 0.0
    %170 = vmatprep.subr.mxu0 0.0
    %171 = vmatpush1.msra.mxu0 %v53
    %172 = vmatprep.subr.mxu0 0.0
    %173 = vmatpush1.msra.mxu0 %v50
    %174 = vmatprep.subr.mxu0 0.0
    %175 = vmatpush1.msra.mxu0 %v47
    %176 = vmatprep.subr.mxu0 0.0
    %177 = vmatpush1.msra.mxu0 %v44
    %178 = vmatprep.subr.mxu0 0.0
    %179 = vmatpush2.msra.mxu0 0.0
    %180 = vmatprep.subr.mxu0 0.0
    %181 = vmatpush2.msra.mxu0 0.0
    %182 = vmatprep.subr.mxu0 0.0
    %183 = vmatpush2.msra.mxu0 0.0
    %184 = vmatprep.subr.mxu0 0.0
    %185 = vmatpush2.msra.mxu0 0.0
    %186 = vmatprep.subr.mxu0 0.0
    %187 = vmatpush2.msra.mxu0 0.0
    %188 = vmatprep.subr.mxu0 0.0
    %189 = vmatpush2.msra.mxu0 0.0
    %190 = vmatprep.subr.mxu0 0.0
    %191 = vmatpush2.msra.mxu0 0.0
    %192 = vmatprep.subr.mxu0 0.0
    %193 = vmatpush2.msra.mxu0 0.0
    %194 = vmatprep.subr.mxu0 0.0
    %195 = vmatpush2.msra.mxu0 0.0
    %196 = vmatprep.subr.mxu0 0.0
    %197 = vmatpush2.msra.mxu0 0.0
    %198 = vmatprep.subr.mxu0 0.0
    %199 = vmatpush2.msra.mxu0 0.0
    %200 = vmatprep.subr.mxu0 0.0
    %201 = vmatpush2.msra.mxu0 0.0
    %202 = vmatprep.subr.mxu0 0.0
    %203 = vmatpush2.msra.mxu0 0.0
    %204 = vmatprep.subr.mxu0 0.0
    %205 = vmatpush2.msra.mxu0 0.0
    %206 = vmatprep.subr.mxu0 0.0
    %207 = vmatpush2.msra.mxu0 0.0
    %208 = vmatprep.subr.mxu0 0.0
    %209 = vmatpush2.msra.mxu0 0.0
    %210 = vmatprep.mubr.f32.mxu0 0.0
    %211 = vmatmul.mubr.f32.gmra.mxu0 %v73
    %v212 = vpop.f32.mrf.mxu0
    %v213 = vadd.f32 %v67, %v212
    %v214 = vpop.f32.mrf.mxu0
    %215 = vdwg.mxu0
    %v216 = vmul.f32 %v142, %v144
    %v217 = vadd.f32 %v216, %v213
    %218 = vst [vmem:[#allocation7] sm:$0xff] %v217
    // Predicated region
    $region22: #{style_split.1} parent=1 // pred_check
      _
    $region23: #{style_split.1} parent=1 // pred_check_branch
      %220 = sbr.rel (0) target = $region25
    $region24: #{style_split.1} parent=1 // pred_region
      %s222 = ssub.s32 128, 128
      %223 = vsyncadd [#allocation4], %s222
      %s225 = sshll.u32 [#allocation7], 4
      %s226 = int_to_ptr.vmem [resolvable:$true] %s225
      %228 = dma.vmem_to_hbm [thread:$0]  %s226, 128, %s3, [#allocation4]
    $region25: #{style_split.1} parent=1 // pred_fallthru
      _
    // Predicated region
    $region26: #{style_split.1} parent=1 // pred_check
      _
    $region27: #{style_split.1} parent=1 // pred_check_branch
      %230 = sbr.rel (0) target = $region29
    $region28: #{style_split.1} parent=1 // pred_region
      %231 = dma.done [#allocation4], 128
    $region29: #{style_split.1} parent=1 // pred_fallthru
      _
    %232 = vsyncpa [#allocation3], 1
    %233 = vsyncpa [#allocation6], 1
    %234 = vsyncpa [#allocation4], 1

</llo_original>
